<compile_context>
chip_gen: v7x
topology: tpu7x:2x2x1
jax: 0.10.0
libtpu: 0.0.40
codegen_flags: <defaults>
</compile_context>

<pallas_src>
import functools

import jax
import jax.numpy as jnp
from jax.experimental import pallas as pl
from jax.experimental.pallas import tpu as pltpu


def _round_up(x, m):
    return ((x + m - 1) // m) * m


def _cdiv(a, b):
    return -(-a // b)


def _ce_ls_kernel(logits_ref, label_ref, loss_ref,
                  m_acc, s_acc, xsum_acc, xlab_acc,
                  *, epsilon, num_classes, class_tile, batch_tile, needs_mask):
    """One (batch tile, class tile) grid step of label-smoothed cross entropy.

    Streaming (online-logsumexp) form over the class axis:
        m       = running max(x)                      (per row)
        s       = running sum(exp(x - m))
        x_sum   = running sum(x)
        x_label = running sum(where(class == label, x, 0))
        loss_i  = (log(s) + m) - (1 - eps) * x_label - (eps / C) * x_sum
    """
    i = pl.program_id(0)          # batch-tile index  ("parallel")
    j = pl.program_id(1)          # class-tile index  ("arbitrary", last)
    nj = pl.num_programs(1)

    @pl.when(j == 0)
    def _():
        m_acc[...] = jnp.full(m_acc.shape, -jnp.inf, jnp.float32)
        s_acc[...] = jnp.zeros(s_acc.shape, jnp.float32)
        xsum_acc[...] = jnp.zeros(xsum_acc.shape, jnp.float32)
        xlab_acc[...] = jnp.zeros(xlab_acc.shape, jnp.float32)

    x = logits_ref[...].astype(jnp.float32)                    # (TB, TC) f32 math

    # Labels were DMA'd once (constant block index); slice this tile's rows.
    off = pl.multiple_of(i * batch_tile, 8)
    lbl = label_ref[pl.ds(off, batch_tile), :]                  # (TB, 1) int32

    cls = jax.lax.broadcasted_iota(jnp.int32, x.shape, 1) + j * class_tile

    if needs_mask:                                              # partial last class tile
        valid = cls < num_classes
        x_for_max = jnp.where(valid, x, -jnp.inf)
        x_for_sum = jnp.where(valid, x, 0.0)
    else:
        x_for_max = x
        x_for_sum = x

    m_tile = jnp.max(x_for_max, axis=1, keepdims=True)          # (TB, 1)
    m_new = jnp.maximum(m_acc[...], m_tile)

    e = jnp.exp(x - m_new)                                      # only shifted slab
    if needs_mask:
        e = jnp.where(valid, e, 0.0)

    alpha = jnp.exp(m_acc[...] - m_new)                         # rescale old sum
    s_acc[...] = alpha * s_acc[...] + jnp.sum(e, axis=1, keepdims=True)
    m_acc[...] = m_new
    xsum_acc[...] = xsum_acc[...] + jnp.sum(x_for_sum, axis=1, keepdims=True)
    xlab_acc[...] = xlab_acc[...] + jnp.sum(
        jnp.where(cls == lbl, x, 0.0), axis=1, keepdims=True)

    @pl.when(j == nj - 1)
    def _():
        lse = jnp.log(s_acc[...]) + m_acc[...]
        loss_ref[...] = (lse
                         - (1.0 - epsilon) * xlab_acc[...]
                         - (epsilon / num_classes) * xsum_acc[...])


def _choose_tiling(batch, num_classes, in_dtype, *, class_tile=None):
    """Per-generation batch/class tile sizes and an explicit VMEM limit."""
    in_bytes = jnp.dtype(in_dtype).itemsize
    try:
        vmem_bytes = int(pltpu.get_tpu_info().vmem_capacity_bytes)
    except Exception:
        vmem_bytes = 64 * 1024 * 1024                 # conservative: v7x 64 MiB / TC
    vmem_limit = min(vmem_bytes * 3 // 4, 112 * 1024 * 1024)

    # Headroom: label buffer (resident, ~4B/row), output/scratch columns, misc.
    headroom = 8 * 1024 * 1024 + 8 * _round_up(batch, 1024)
    budget = max(vmem_limit - headroom, 2 * 1024 * 1024)

    # Sublane packing: f32 -> 8, bf16 -> 16, 8-bit -> 32 rows per vreg tile.
    sub = 8 * (4 // in_bytes) if in_bytes < 4 else 8

    # Per (row, class-element) VMEM cost: double-buffered input tile plus the
    # live f32 temporaries inside the kernel (x upcast, exp slab, iota/select).
    per_elem = 2 * in_bytes + 4 * 4

    if class_tile is not None:
        tc = int(class_tile)
    elif num_classes <= 1024 or budget // (per_elem * num_classes + 64) >= 256:
        tc = num_classes                              # single class tile
    else:
        # Vocab-scale C (or small-VMEM v7x): stream classes with a lane-aligned
        # tile sized so ~512-row batch tiles still fit.
        tc = max(128, ((budget // (512 * per_elem)) // 128) * 128)
        tc = min(tc, (num_classes // 128) * 128)
    if tc != num_classes:
        assert tc % 128 == 0 and tc >= 128, tc

    tb = budget // (per_elem * tc + 64)
    # Ensure >= 2 (ideally 4) batch grid steps so the "parallel" axis actually
    # shards across both v7x TensorCores; per-step overhead is ~0.35 us.
    want_steps = max(1, min(4, _cdiv(batch, sub)))
    tb = min(tb, 8192, _round_up(_cdiv(batch, want_steps), sub))
    tb = max(sub, tb - (tb % sub))
    return tb, tc, vmem_limit


def cross_entropy_label_smooth(inputs, label, *, num_classes, epsilon=0.1,
                               is_mean=False, class_tile=None):
    """Pallas port of CrossEntropyLabelSmooth.forward (l == 0 path).

    Args:
      inputs: (batch, num_classes) logits, any float dtype (math is f32).
      label : (batch,) integer class indices.
      is_mean: NOTE — matches the PyTorch module's (inverted-sounding) branch:
               True  -> per-sample losses, shape (batch,)
               False -> scalar batch mean (the module default).
      class_tile: optional override of the class-tile width (testing / tuning).
    """
    batch, c = inputs.shape
    assert c == num_classes, (c, num_classes)

    tb, tc, vmem_limit = _choose_tiling(batch, c, inputs.dtype,
                                        class_tile=class_tile)
    n_bt = _cdiv(batch, tb)
    n_ct = _cdiv(c, tc)
    needs_mask = (c % tc) != 0

    # Labels are tiny: pad to n_bt*tb rows so the kernel's pl.ds slice is never
    # out of bounds, and DMA them once (constant block index).
    lab_rows = n_bt * tb
    label2d = label.astype(jnp.int32).reshape(batch, 1)
    if lab_rows != batch:
        label2d = jnp.pad(label2d, ((0, lab_rows - batch), (0, 0)))

    in_bytes = jnp.dtype(inputs.dtype).itemsize
    cost = pl.CostEstimate(
        flops=8 * batch * c,
        transcendentals=batch * c + 4 * batch,         # exp per elem + per-row log/rescale
        bytes_accessed=batch * c * in_bytes + lab_rows * 4 + batch * 4,
    )

    kernel = functools.partial(
        _ce_ls_kernel,
        epsilon=float(epsilon), num_classes=c,
        class_tile=tc, batch_tile=tb, needs_mask=needs_mask)

    per_sample = pl.pallas_call(
        kernel,
        out_shape=jax.ShapeDtypeStruct((batch, 1), jnp.float32),
        grid=(n_bt, n_ct),
        in_specs=[
            pl.BlockSpec((tb, tc), lambda i, j: (i, j)),        # logits tile
            pl.BlockSpec((lab_rows, 1), lambda i, j: (0, 0)),   # labels: fetched once
        ],
        out_specs=pl.BlockSpec((tb, 1), lambda i, j: (i, 0)),
        scratch_shapes=[pltpu.VMEM((tb, 1), jnp.float32) for _ in range(4)],
        compiler_params=pltpu.CompilerParams(
            dimension_semantics=("parallel", "arbitrary"),
            vmem_limit_bytes=int(vmem_limit),
        ),
        cost_estimate=cost,
    )(inputs, label2d)

    per_sample = per_sample[:, 0]
    if is_mean:
        return per_sample                              # (batch,)
    return jnp.mean(per_sample)                        # scalar


def _reference(inputs, label, num_classes, epsilon):
    x = inputs.astype(jnp.float32)
    log_probs = jax.nn.log_softmax(x, axis=1)
    onehot = jax.nn.one_hot(label, num_classes, dtype=jnp.float32)
    targets = (1.0 - epsilon) * onehot + epsilon / num_classes
    return jnp.sum(-targets * log_probs, axis=1)


if __name__ == "__main__":
    epsilon = 0.1
    key = jax.random.PRNGKey(0)

    # (batch, num_classes, dtype, forced class tile)
    cases = [
        (64, 128, jnp.float32, None),    # aligned batch, single class tile
        (10, 32, jnp.float32, None),     # ragged batch -> partial last batch block
        (32, 64, jnp.bfloat16, None),    # native bf16 logits streamed in
        (24, 384, jnp.float32, 128),     # forced class streaming, C % tc == 0
        (16, 200, jnp.float32, 128),     # forced class streaming, masked last class tile
    ]
    for batch, num_classes, dtype, ctile in cases:
        key, k_logits, k_label = jax.random.split(key, 3)
        logits = jax.random.normal(k_logits, (batch, num_classes),
                                   dtype=jnp.float32).astype(dtype)
        label = jax.random.randint(k_label, (batch,), 0, num_classes,
                                   dtype=jnp.int32)

        loss_mean = cross_entropy_label_smooth(
            logits, label, num_classes=num_classes, epsilon=epsilon,
            is_mean=False, class_tile=ctile)
        loss_vec = cross_entropy_label_smooth(
            logits, label, num_classes=num_classes, epsilon=epsilon,
            is_mean=True, class_tile=ctile)
        jax.block_until_ready((loss_mean, loss_vec))

        ref_vec = _reference(logits, label, num_classes, epsilon)
        ref_mean = jnp.mean(ref_vec)

        assert jnp.allclose(loss_vec, ref_vec, atol=1e-4, rtol=1e-5), (
            batch, num_classes, dtype, ctile, loss_vec, ref_vec)
        assert jnp.allclose(loss_mean, ref_mean, atol=1e-4, rtol=1e-5), (
            batch, num_classes, dtype, ctile, loss_mean, ref_mean)

    print("KERNEL_OK")
</pallas_src>

<mosaic_0001>
module attributes {stable_mosaic.version = 11 : i64} {
  func.func @_ce_ls_kernel(%arg0: i32, %arg1: i32, %arg2: memref<16x128xf32, #tpu.memory_space<vmem>>, %arg3: memref<64x1xi32, #tpu.memory_space<vmem>>, %arg4: memref<16x1xf32, #tpu.memory_space<vmem>>, %arg5: memref<16x1xf32, #tpu.memory_space<vmem>>, %arg6: memref<16x1xf32, #tpu.memory_space<vmem>>, %arg7: memref<16x1xf32, #tpu.memory_space<vmem>>, %arg8: memref<16x1xf32, #tpu.memory_space<vmem>>) attributes {dimension_semantics = [#tpu.dimension_semantics<parallel>, #tpu.dimension_semantics<arbitrary>], iteration_bounds = array<i64: 4, 1>, scalar_prefetch = 0 : i64, scratch_operands = 4 : i64, tpu.core_type = #tpu.core_type<tc>, window_params = [{transform_indices = @transform_0, window_bounds = array<i64: 16, 128>}, {pipeline_mode = #tpu.pipeline_mode<synchronous>, transform_indices = @transform_1, window_bounds = array<i64: 64, 1>}, {transform_indices = @transform_2, window_bounds = array<i64: 16, 1>}]} {
    %c0_i32 = arith.constant 0 : i32
    %0 = arith.cmpi eq, %arg1, %c0_i32 : i32
    %1 = arith.extui %0 : i1 to i32
    %c0_i32_0 = arith.constant 0 : i32
    %2 = arith.cmpi ne, %1, %c0_i32_0 : i32
    scf.if %2 {
      %cst_27 = arith.constant 0xFF800000 : f32
      %46 = vector.broadcast %cst_27 : f32 to vector<16x1xf32>
      %c0_28 = arith.constant 0 : index
      %c0_29 = arith.constant 0 : index
      %47 = vector.load %arg5[%c0_28, %c0_29] : memref<16x1xf32, #tpu.memory_space<vmem>>, vector<16x1xf32>
      tpu.vector_store %arg5[%c0_28, %c0_29], %46 {strides = array<i32>} : memref<16x1xf32, #tpu.memory_space<vmem>>, vector<16x1xf32>,
      %cst_30 = arith.constant 0.000000e+00 : f32
      %48 = vector.broadcast %cst_30 : f32 to vector<16x1xf32>
      %c0_31 = arith.constant 0 : index
      %c0_32 = arith.constant 0 : index
      %49 = vector.load %arg6[%c0_31, %c0_32] : memref<16x1xf32, #tpu.memory_space<vmem>>, vector<16x1xf32>
      tpu.vector_store %arg6[%c0_31, %c0_32], %48 {strides = array<i32>} : memref<16x1xf32, #tpu.memory_space<vmem>>, vector<16x1xf32>,
      %cst_33 = arith.constant 0.000000e+00 : f32
      %50 = vector.broadcast %cst_33 : f32 to vector<16x1xf32>
      %c0_34 = arith.constant 0 : index
      %c0_35 = arith.constant 0 : index
      %51 = vector.load %arg7[%c0_34, %c0_35] : memref<16x1xf32, #tpu.memory_space<vmem>>, vector<16x1xf32>
      tpu.vector_store %arg7[%c0_34, %c0_35], %50 {strides = array<i32>} : memref<16x1xf32, #tpu.memory_space<vmem>>, vector<16x1xf32>,
      %cst_36 = arith.constant 0.000000e+00 : f32
      %52 = vector.broadcast %cst_36 : f32 to vector<16x1xf32>
      %c0_37 = arith.constant 0 : index
      %c0_38 = arith.constant 0 : index
      %53 = vector.load %arg8[%c0_37, %c0_38] : memref<16x1xf32, #tpu.memory_space<vmem>>, vector<16x1xf32>
      tpu.vector_store %arg8[%c0_37, %c0_38], %52 {strides = array<i32>} : memref<16x1xf32, #tpu.memory_space<vmem>>, vector<16x1xf32>,
    } else {
    }
    %c0 = arith.constant 0 : index
    %c0_1 = arith.constant 0 : index
    %3 = vector.load %arg2[%c0, %c0_1] : memref<16x128xf32, #tpu.memory_space<vmem>>, vector<16x128xf32>
    %c16_i32 = arith.constant 16 : i32
    %4 = arith.muli %arg0, %c16_i32 : i32
    %5 = tpu.assume_multiple %4, 8 : i32
    %6 = arith.index_cast %5 : i32 to index
    %c0_2 = arith.constant 0 : index
    %7 = vector.load %arg3[%6, %c0_2] : memref<64x1xi32, #tpu.memory_space<vmem>>, vector<16x1xi32>
    %8 = tpu.iota {dimensions = array<i32: 1>} : vector<16x128xi32>
    %c128_i32 = arith.constant 128 : i32
    %9 = arith.muli %arg1, %c128_i32 : i32
    %10 = vector.broadcast %9 : i32 to vector<16x128xi32>
    %11 = arith.addi %8, %10 : vector<16x128xi32>
    %cst = arith.constant dense<0xFF800000> : vector<16xf32>
    %12 = vector.multi_reduction <maximumf>, %3, %cst [1] : vector<16x128xf32> to vector<16xf32>
    %13 = vector.shape_cast %12 : vector<16xf32> to vector<16x1xf32>
    %c0_3 = arith.constant 0 : index
    %c0_4 = arith.constant 0 : index
    %14 = vector.load %arg5[%c0_3, %c0_4] : memref<16x1xf32, #tpu.memory_space<vmem>>, vector<16x1xf32>
    %15 = arith.maximumf %14, %13 : vector<16x1xf32>
    %16 = vector.broadcast %15 : vector<16x1xf32> to vector<16x128xf32>
    %17 = arith.subf %3, %16 : vector<16x128xf32>
    %18 = math.exp %17 : vector<16x128xf32>
    %c0_5 = arith.constant 0 : index
    %c0_6 = arith.constant 0 : index
    %19 = vector.load %arg5[%c0_5, %c0_6] : memref<16x1xf32, #tpu.memory_space<vmem>>, vector<16x1xf32>
    %20 = arith.subf %19, %15 : vector<16x1xf32>
    %21 = math.exp %20 : vector<16x1xf32>
    %c0_7 = arith.constant 0 : index
    %c0_8 = arith.constant 0 : index
    %22 = vector.load %arg6[%c0_7, %c0_8] : memref<16x1xf32, #tpu.memory_space<vmem>>, vector<16x1xf32>
    %23 = arith.mulf %21, %22 : vector<16x1xf32>
    %cst_9 = arith.constant dense<0.000000e+00> : vector<16xf32>
    %24 = vector.multi_reduction <add>, %18, %cst_9 [1] : vector<16x128xf32> to vector<16xf32>
    %25 = vector.shape_cast %24 : vector<16xf32> to vector<16x1xf32>
    %26 = arith.addf %23, %25 : vector<16x1xf32>
    %c0_10 = arith.constant 0 : index
    %c0_11 = arith.constant 0 : index
    %27 = vector.load %arg6[%c0_10, %c0_11] : memref<16x1xf32, #tpu.memory_space<vmem>>, vector<16x1xf32>
    tpu.vector_store %arg6[%c0_10, %c0_11], %26 {strides = array<i32>} : memref<16x1xf32, #tpu.memory_space<vmem>>, vector<16x1xf32>,
    %c0_12 = arith.constant 0 : index
    %c0_13 = arith.constant 0 : index
    %28 = vector.load %arg5[%c0_12, %c0_13] : memref<16x1xf32, #tpu.memory_space<vmem>>, vector<16x1xf32>
    tpu.vector_store %arg5[%c0_12, %c0_13], %15 {strides = array<i32>} : memref<16x1xf32, #tpu.memory_space<vmem>>, vector<16x1xf32>,
    %c0_14 = arith.constant 0 : index
    %c0_15 = arith.constant 0 : index
    %29 = vector.load %arg7[%c0_14, %c0_15] : memref<16x1xf32, #tpu.memory_space<vmem>>, vector<16x1xf32>
    %cst_16 = arith.constant dense<0.000000e+00> : vector<16xf32>
    %30 = vector.multi_reduction <add>, %3, %cst_16 [1] : vector<16x128xf32> to vector<16xf32>
    %31 = vector.shape_cast %30 : vector<16xf32> to vector<16x1xf32>
    %32 = arith.addf %29, %31 : vector<16x1xf32>
    %c0_17 = arith.constant 0 : index
    %c0_18 = arith.constant 0 : index
    %33 = vector.load %arg7[%c0_17, %c0_18] : memref<16x1xf32, #tpu.memory_space<vmem>>, vector<16x1xf32>
    tpu.vector_store %arg7[%c0_17, %c0_18], %32 {strides = array<i32>} : memref<16x1xf32, #tpu.memory_space<vmem>>, vector<16x1xf32>,
    %c0_19 = arith.constant 0 : index
    %c0_20 = arith.constant 0 : index
    %34 = vector.load %arg8[%c0_19, %c0_20] : memref<16x1xf32, #tpu.memory_space<vmem>>, vector<16x1xf32>
    %35 = vector.broadcast %7 : vector<16x1xi32> to vector<16x128xi32>
    %36 = arith.cmpi eq, %11, %35 : vector<16x128xi32>
    %cst_21 = arith.constant 0.000000e+00 : f32
    %37 = vector.broadcast %cst_21 : f32 to vector<16x128xf32>
    %38 = arith.select %36, %3, %37 : vector<16x128xi1>, vector<16x128xf32>
    %cst_22 = arith.constant dense<0.000000e+00> : vector<16xf32>
    %39 = vector.multi_reduction <add>, %38, %cst_22 [1] : vector<16x128xf32> to vector<16xf32>
    %40 = vector.shape_cast %39 : vector<16xf32> to vector<16x1xf32>
    %41 = arith.addf %34, %40 : vector<16x1xf32>
    %c0_23 = arith.constant 0 : index
    %c0_24 = arith.constant 0 : index
    %42 = vector.load %arg8[%c0_23, %c0_24] : memref<16x1xf32, #tpu.memory_space<vmem>>, vector<16x1xf32>
    tpu.vector_store %arg8[%c0_23, %c0_24], %41 {strides = array<i32>} : memref<16x1xf32, #tpu.memory_space<vmem>>, vector<16x1xf32>,
    %c0_i32_25 = arith.constant 0 : i32
    %43 = arith.cmpi eq, %arg1, %c0_i32_25 : i32
    %44 = arith.extui %43 : i1 to i32
    %c0_i32_26 = arith.constant 0 : i32
    %45 = arith.cmpi ne, %44, %c0_i32_26 : i32
    scf.if %45 {
      %c0_27 = arith.constant 0 : index
      %c0_28 = arith.constant 0 : index
      %46 = vector.load %arg6[%c0_27, %c0_28] : memref<16x1xf32, #tpu.memory_space<vmem>>, vector<16x1xf32>
      %47 = math.log %46 : vector<16x1xf32>
      %c0_29 = arith.constant 0 : index
      %c0_30 = arith.constant 0 : index
      %48 = vector.load %arg5[%c0_29, %c0_30] : memref<16x1xf32, #tpu.memory_space<vmem>>, vector<16x1xf32>
      %49 = arith.addf %47, %48 : vector<16x1xf32>
      %c0_31 = arith.constant 0 : index
      %c0_32 = arith.constant 0 : index
      %50 = vector.load %arg8[%c0_31, %c0_32] : memref<16x1xf32, #tpu.memory_space<vmem>>, vector<16x1xf32>
      %cst_33 = arith.constant 0.899999976 : f32
      %51 = vector.broadcast %cst_33 : f32 to vector<16x1xf32>
      %52 = arith.mulf %51, %50 : vector<16x1xf32>
      %53 = arith.subf %49, %52 : vector<16x1xf32>
      %c0_34 = arith.constant 0 : index
      %c0_35 = arith.constant 0 : index
      %54 = vector.load %arg7[%c0_34, %c0_35] : memref<16x1xf32, #tpu.memory_space<vmem>>, vector<16x1xf32>
      %cst_36 = arith.constant 7.812500e-04 : f32
      %55 = vector.broadcast %cst_36 : f32 to vector<16x1xf32>
      %56 = arith.mulf %55, %54 : vector<16x1xf32>
      %57 = arith.subf %53, %56 : vector<16x1xf32>
      %c0_37 = arith.constant 0 : index
      %c0_38 = arith.constant 0 : index
      %58 = vector.load %arg4[%c0_37, %c0_38] : memref<16x1xf32, #tpu.memory_space<vmem>>, vector<16x1xf32>
      tpu.vector_store %arg4[%c0_37, %c0_38], %57 {strides = array<i32>} : memref<16x1xf32, #tpu.memory_space<vmem>>, vector<16x1xf32>,
    } else {
    }
    return
  }
  func.func @transform_0(%arg0: i32, %arg1: i32) -> (i32, i32) {
    %c0_i32 = arith.constant 0 : i32
    return %arg0, %arg1 : i32, i32
  }
  func.func @transform_1(%arg0: i32, %arg1: i32) -> (i32, i32) {
    %c0_i32 = arith.constant 0 : i32
    %c0_i32_0 = arith.constant 0 : i32
    %c0_i32_1 = arith.constant 0 : i32
    return %c0_i32, %c0_i32_0 : i32, i32
  }
  func.func @transform_2(%arg0: i32, %arg1: i32) -> (i32, i32) {
    %c0_i32 = arith.constant 0 : i32
    %c0_i32_0 = arith.constant 0 : i32
    return %arg0, %c0_i32 : i32, i32
  }
}

</mosaic_0001>

<llo_original>
// kernel: tpu_custom_call.1
$region0: #{tpu_custom_call.1}
  #allocation0 [shape = 'u32[]', space=smem, size = 0x4, offset = 0x4, fixed_abs, tag = 'smem constant byte address 0x4 - core index']
  #allocation1 [shape = 'u32[144,128]{1,0:T(1,128)}', space=vmem, size = 0x12000, scoped, tag = 'internal scratch']
  #allocation2 [shape = 'f32[16,1]{1,0:T(8,128)}', space=vmem, size = 0x2000, scoped, tag = 'scratch operand']
  #allocation3 [shape = 'f32[16,1]{1,0:T(8,128)}', space=vmem, size = 0x2000, scoped, tag = 'scratch operand']
  #allocation4 [shape = 'f32[16,1]{1,0:T(8,128)}', space=vmem, size = 0x2000, scoped, tag = 'scratch operand']
  #allocation5 [shape = 'f32[16,1]{1,0:T(8,128)}', space=vmem, size = 0x2000, scoped, tag = 'scratch operand']
  %s0 = inlined_call_operand.vmem [shape: f32[64,128], index: 0, kind: input, shape index: {}]
  %s1 = inlined_call_operand.vmem [shape: s32[64,1], index: 1, kind: input, shape index: {}]
  %s2 = inlined_call_operand.vmem [shape: f32[64,1], index: 2, kind: output, shape index: {}]
  %s3 = sld [smem:[#allocation0]]
  $region49: #{tpu_custom_call.1} parent=0
    _
  %s5 = ssub.s32 1, %s3
  %s6 = scalar_select 0, %s5, %s3
  loop: start=0, step=1, limit=6
  $region2: #{tpu_custom_call.1} parent=0 // loop_pre_header
    _
  $region3: #{tpu_custom_call.1} parent=0 // loop_header
    %s8 = sphi 0, %s12
    %p9 = scmp.ge.s32.totalorder %s8, 6
    %s15 = sphi 0, %s27
    %s16 = sphi 0, %s23
    %s17 = sphi 0, %s15
    %s18 = sphi 0, %s16
    %s19 = sphi 0, %s17
    %s20 = sphi 0, %s18
    %s32 = sphi 0, %s34
    %s35 = sphi 0, %s32
    %s36 = sphi 0, %s35
    %s52 = sphi 0, %s36
    %s56 = sphi 0, %s56
    %s58 = sphi 0, %s56
    %s59 = sphi 0, %s58
    %s73 = sphi 0, %s59
    %s79 = sphi 0, %s81
    %s82 = sphi 0, %s79
    %s83 = sphi 0, %s82
    %s99 = sphi 0, %s83
  $region4: #{tpu_custom_call.1} parent=0 // loop_header_branch
    %11 = sbr.rel (%p9) target = $region8
  $region5: #{tpu_custom_call.1} parent=0 // loop_body
    %s13 = ssub.s32 %s8, 1
    %s14 = ssub.s32 %s8, 2
    %s21 = sadd.s32 1, %s16
    %p22 = scmp.ge.s32.totalorder %s21, 1
    %s23 = scalar_select %p22, 0, %s21
    %s24 = sadd.s32 1, %s15
    %s25 = scalar_select %p22, %s24, %s15
    %p26 = scmp.ge.s32.totalorder %s25, 4
    %s27 = scalar_select %p26, 0, %s25
    %s28 = ssub.s32 %s15, %s27
    %s29 = ssub.s32 %s16, %s23
    %s30 = sor.u32 %s28, %s29
    %p31 = scmp.eq.s32.totalorder %s30, 0
    %s33 = sadd.s32 %s32, 1
    %s34 = scalar_select %p31, %s32, %s33
    %p37 = pneg %p31
    %p38 = scmp.eq.s32.totalorder %s8, 3
    %p39 = por %p37, %p38
    %p40 = scmp.ne.s32.totalorder %s32, %s35
    %p41 = scmp.eq.s32.totalorder %s8, 0
    %p42 = por %p40, %p41
    %p43 = scmp.ne.s32.totalorder %s32, %s35
    %p44 = scmp.eq.s32.totalorder %s13, 3
    %p45 = por %p43, %p44
    %p46 = scmp.ne.s32.totalorder %s35, %s36
    %p47 = scmp.eq.s32.totalorder %s13, 0
    %p48 = por %p46, %p47
    %p49 = scmp.ne.s32.totalorder %s35, %s36
    %p50 = scmp.eq.s32.totalorder %s14, 3
    %p51 = por %p49, %p50
    %p53 = scmp.ne.s32.totalorder %s36, %s52
    %p54 = scmp.eq.s32.totalorder %s14, 0
    %p55 = por %p53, %p54
    %s57 = sadd.s32 %s56, 1
    %p60 = scmp.eq.s32.totalorder %s8, 3
    %p61 = scmp.ne.s32.totalorder %s56, %s58
    %p62 = scmp.eq.s32.totalorder %s8, 0
    %p63 = por %p61, %p62
    %p64 = scmp.ne.s32.totalorder %s56, %s58
    %p65 = scmp.eq.s32.totalorder %s13, 3
    %p66 = por %p64, %p65
    %p67 = scmp.ne.s32.totalorder %s58, %s59
    %p68 = scmp.eq.s32.totalorder %s13, 0
    %p69 = por %p67, %p68
    %p70 = scmp.ne.s32.totalorder %s58, %s59
    %p71 = scmp.eq.s32.totalorder %s14, 3
    %p72 = por %p70, %p71
    %p74 = scmp.ne.s32.totalorder %s59, %s73
    %p75 = scmp.eq.s32.totalorder %s14, 0
    %p76 = por %p74, %p75
    %s77 = ssub.s32 %s15, %s27
    %p78 = scmp.eq.s32.totalorder %s77, 0
    %s80 = sadd.s32 %s79, 1
    %s81 = scalar_select %p78, %s79, %s80
    %p84 = pneg %p78
    %p85 = scmp.eq.s32.totalorder %s8, 3
    %p86 = por %p84, %p85
    %p87 = scmp.ne.s32.totalorder %s79, %s82
    %p88 = scmp.eq.s32.totalorder %s8, 0
    %p89 = por %p87, %p88
    %p90 = scmp.ne.s32.totalorder %s79, %s82
    %p91 = scmp.eq.s32.totalorder %s13, 3
    %p92 = por %p90, %p91
    %p93 = scmp.ne.s32.totalorder %s82, %s83
    %p94 = scmp.eq.s32.totalorder %s13, 0
    %p95 = por %p93, %p94
    %p96 = scmp.ne.s32.totalorder %s82, %s83
    %p97 = scmp.eq.s32.totalorder %s14, 3
    %p98 = por %p96, %p97
    %p100 = scmp.ne.s32.totalorder %s83, %s99
    %p101 = scmp.eq.s32.totalorder %s14, 0
    %p102 = por %p100, %p101
    %p103 = scmp.le.s32.totalorder 1, %s8
    %p104 = scmp.lt.s32.totalorder %s8, 5
    %p105 = pnand %p103, %p104
    %p106 = pneg %p105
    // Predicated region
    $region9: #{tpu_custom_call.1} parent=5 // pred_check
      _
    $region10: #{tpu_custom_call.1} parent=5 // pred_check_branch
      %108 = sbr.rel (%p105) target = $region12
    $region11: #{tpu_custom_call.1} parent=5 // pred_region
      %s109 = ssub.s32 %s8, 1
      // Predicated region
      $region13: #{tpu_custom_call.1} parent=11 // pred_check
        %p110 = pneg %p69
      $region14: #{tpu_custom_call.1} parent=11 // pred_check_branch
        %112 = sbr.rel (%p110) target = $region16
      $region15: #{tpu_custom_call.1} parent=11 // pred_region
        _
      $region16: #{tpu_custom_call.1} parent=11 // pred_fallthru
        _
    $region12: #{tpu_custom_call.1} parent=5 // pred_fallthru
      _
    %p113 = scmp.lt.s32.totalorder %s8, 4
    // Predicated region
    $region17: #{tpu_custom_call.1} parent=5 // pred_check
      %p114 = pneg %p113
    $region18: #{tpu_custom_call.1} parent=5 // pred_check_branch
      %116 = sbr.rel (%p114) target = $region20
    $region19: #{tpu_custom_call.1} parent=5 // pred_region
      // Predicated region
      $region21: #{tpu_custom_call.1} parent=19 // pred_check
        %p117 = pneg %p42
      $region22: #{tpu_custom_call.1} parent=19 // pred_check_branch
        %119 = sbr.rel (%p117) target = $region24
      $region23: #{tpu_custom_call.1} parent=19 // pred_region
        %s120 = smul.u32 2, %s15
        %p121 = scmp.lt.s32.totalorder %s120, 7
        %s122 = scalar_select %p121, %s120, 7
        %p123 = scmp.lt.s32.totalorder %s16, 0
        %s124 = scalar_select %p123, %s16, 0
        %s125 = sadd.s32 %s124, %s122
        %s126 = smul.addr %s125, 8
        %s127 = scalar_lea.vmem %s0, %s126
        %s128 = smul.u32 2, %s15
      $region24: #{tpu_custom_call.1} parent=19 // pred_fallthru
        _
    $region20: #{tpu_custom_call.1} parent=5 // pred_fallthru
      _
    %p129 = scmp.le.s32.totalorder 1, %s8
    %p130 = scmp.lt.s32.totalorder %s8, 5
    %p131 = pnand %p129, %p130
    %p132 = pneg %p131
    // Predicated region
    $region25: #{tpu_custom_call.1} parent=5 // pred_check
      _
    $region26: #{tpu_custom_call.1} parent=5 // pred_check_branch
      %134 = sbr.rel (%p131) target = $region28
    $region27: #{tpu_custom_call.1} parent=5 // pred_region
      %s135 = ssub.s32 %s8, 1
      %s136 = smul.u32 2, %s17
      %p137 = scmp.lt.s32.totalorder %s136, 7
      %s138 = scalar_select %p137, %s136, 7
      %p139 = scmp.lt.s32.totalorder %s18, 0
      %s140 = scalar_select %p139, %s18, 0
      %s141 = sadd.s32 %s140, %s138
      %s142 = smul.addr %s141, 8
      %s143 = scalar_lea.vmem %s0, %s142
      %p144 = pneg %p48
      %p145 = pneg %p45
      %p146 = pneg %p69
      %p147 = pneg %p66
      %p148 = pneg %p95
      %p149 = pneg %p92
      %s150 = smul.u32 2, %s17
      %p151 = scmp.lt.s32.totalorder %s150, 7
      %s152 = scalar_select %p151, %s150, 7
      %s153 = smul.addr %s152, 8
      %s154 = scalar_lea.vmem %s2, %s153
      %s155 = smul.u32 2, %s17
      %p156 = scmp.lt.s32.totalorder %s155, 7
      %s157 = scalar_select %p156, %s155, 7
      %p158 = scmp.lt.s32.totalorder %s18, 0
      %s159 = scalar_select %p158, %s18, 0
      %s160 = sadd.s32 %s159, %s157
      %s161 = smul.addr %s160, 8
      %s162 = scalar_lea.vmem %s0, %s161
      %s163 = smul.u32 2, %s17
      %s164 = smul.u32 2, %s17
      %p165 = scmp.lt.s32.totalorder %s164, 7
      %s166 = scalar_select %p165, %s164, 7
      %s167 = smul.addr %s166, 8
      %s168 = scalar_lea.vmem %s2, %s167
      %s169 = smul.u32 2, %s17
      %p170 = scmp.eq.s32.totalorder %s18, 0
      // Predicated region
      $region29: #{tpu_custom_call.1} parent=27 // pred_check
        %p171 = pneg %p170
      $region30: #{tpu_custom_call.1} parent=27 // pred_check_branch
        %173 = sbr.rel (%p171) target = $region32
      $region31: #{tpu_custom_call.1} parent=27 // pred_region
        %vm174 = vcmask 7168
        %175 = vst.msk [vmem:[#allocation2] sm:$0xff] %vm174, -inf
        %176 = vst.msk [vmem:[#allocation2 + $0x8] sm:$0xff] %vm174, -inf
        %177 = vst.msk [vmem:[#allocation3] sm:$0xff] %vm174, 0.0
        %178 = vst.msk [vmem:[#allocation3 + $0x8] sm:$0xff] %vm174, 0.0
        %179 = vst.msk [vmem:[#allocation4] sm:$0xff] %vm174, 0.0
        %180 = vst.msk [vmem:[#allocation4 + $0x8] sm:$0xff] %vm174, 0.0
        %181 = vst.msk [vmem:[#allocation5] sm:$0xff] %vm174, 0.0
        %182 = vst.msk [vmem:[#allocation5 + $0x8] sm:$0xff] %vm174, 0.0
      $region32: #{tpu_custom_call.1} parent=27 // pred_fallthru
        _
      %v183 = vld [vmem:[%s162] sm:$0xff]
      %v184 = vld [vmem:[%s162 + $0x8] sm:$0xff]
      %s185 = smul.u32 %s17, 16
      %s186 = scalar_lea.vmem %s1, %s185
      %v187 = vld [vmem:[%s186] sm:$0xff]
      %v188 = vld [vmem:[%s186 + $0x8] sm:$0xff]
      %v189 = vlaneseq
      %v190 = vand.u32 %v189, 127
      %s191 = smul.u32 %s18, 128
      %v192 = vstv %s191
      %v193 = vadd.s32 %v190, %v192
      %194 = vmax.xlane.f32.xlu0 %v183
      %v195 = vpop.xlane.xlu0 %194
      %196 = vmax.xlane.f32.xlu0 %v184
      %v197 = vpop.xlane.xlu0 %196
      %v198 = vld [vmem:[#allocation2] sm:$0xff]
      %v199 = vld [vmem:[#allocation2 + $0x8] sm:$0xff]
      %v200 = vmax.f32 %v198, %v195
      %v201 = vmax.f32 %v199, %v197
      %203 = vset.pattern.permute.xlu0 0
      %204 = vperm.xlu0 %203, %v200
      %v205 = vpop.permute.xlu0 %204
      %208 = vset.pattern.permute.xlu0 0
      %209 = vperm.xlu0 %208, %v201
      %v210 = vpop.permute.xlu0 %209
      %v212 = vsub.f32 %v183, %v205
      %v213 = vsub.f32 %v184, %v210
      %v214 = vmul.f32 %v212, 1.442695
      %v215 = vpow.pop %v214
      %v216 = vmul.f32 %v213, 1.442695
      %v217 = vpow.pop %v216
      %v218 = vsub.f32 %v198, %v200
      %v219 = vsub.f32 %v199, %v201
      %v220 = vmul.f32 %v218, 1.442695
      %v221 = vpow.pop %v220
      %v222 = vmul.f32 %v219, 1.442695
      %v223 = vpow.pop %v222
      %v224 = vld [vmem:[#allocation3] sm:$0xff]
      %v225 = vld [vmem:[#allocation3 + $0x8] sm:$0xff]
      %v226 = vmul.f32 %v221, %v224
      %v227 = vmul.f32 %v223, %v225
      %228 = vadd.xlane.f32.xlu0 %v215
      %v229 = vpop.xlane.xlu0 %228
      %230 = vadd.xlane.f32.xlu0 %v217
      %v231 = vpop.xlane.xlu0 %230
      %v232 = vadd.f32 %v226, %v229
      %v233 = vadd.f32 %v227, %v231
      %vm234 = vcmask 7168
      %235 = vst.msk [vmem:[#allocation3] sm:$0xff] %vm234, %v232
      %236 = vst.msk [vmem:[#allocation3 + $0x8] sm:$0xff] %vm234, %v233
      %237 = vst.msk [vmem:[#allocation2] sm:$0xff] %vm234, %v200
      %238 = vst.msk [vmem:[#allocation2 + $0x8] sm:$0xff] %vm234, %v201
      %v239 = vld [vmem:[#allocation4] sm:$0xff]
      %v240 = vld [vmem:[#allocation4 + $0x8] sm:$0xff]
      %241 = vadd.xlane.f32.xlu0 %v183
      %v242 = vpop.xlane.xlu0 %241
      %243 = vadd.xlane.f32.xlu0 %v184
      %v244 = vpop.xlane.xlu0 %243
      %v245 = vadd.f32 %v239, %v242
      %v246 = vadd.f32 %v240, %v244
      %247 = vst.msk [vmem:[#allocation4] sm:$0xff] %vm234, %v245
      %248 = vst.msk [vmem:[#allocation4 + $0x8] sm:$0xff] %vm234, %v246
      %v249 = vld [vmem:[#allocation5] sm:$0xff]
      %v250 = vld [vmem:[#allocation5 + $0x8] sm:$0xff]
      %251 = vset.pattern.permute.xlu0 0
      %252 = vperm.xlu0 %251, %v187
      %v253 = vpop.permute.xlu0 %252
      %254 = vset.pattern.permute.xlu0 0
      %255 = vperm.xlu0 %254, %v188
      %v256 = vpop.permute.xlu0 %255
      %vm257 = vcmp.eq.s32.totalorder %v193, %v253
      %vm258 = vcmp.eq.s32.totalorder %v193, %v256
      %v259 = vsel %vm257, %v183, 0.0
      %v260 = vsel %vm258, %v184, 0.0
      %261 = vadd.xlane.f32.xlu0 %v259
      %v262 = vpop.xlane.xlu0 %261
      %263 = vadd.xlane.f32.xlu0 %v260
      %v264 = vpop.xlane.xlu0 %263
      %v265 = vadd.f32 %v249, %v262
      %v266 = vadd.f32 %v250, %v264
      %267 = vst.msk [vmem:[#allocation5] sm:$0xff] %vm234, %v265
      %268 = vst.msk [vmem:[#allocation5 + $0x8] sm:$0xff] %vm234, %v266
      // Predicated region
      $region33: #{tpu_custom_call.1} parent=27 // pred_check
        %p269 = pneg %p170
      $region34: #{tpu_custom_call.1} parent=27 // pred_check_branch
        %271 = sbr.rel (%p269) target = $region36
      $region35: #{tpu_custom_call.1} parent=27 // pred_region
        %v272 = vld [vmem:[#allocation3] sm:$0xff]
        %v273 = vld [vmem:[#allocation3 + $0x8] sm:$0xff]
        %v274 = vlog2.pop %v272
        %v275 = vmul.f32 %v274, 0.6931472
        %v276 = vlog2.pop %v273
        %v277 = vmul.f32 %v276, 0.6931472
        %v278 = vld [vmem:[#allocation2] sm:$0xff]
        %v279 = vld [vmem:[#allocation2 + $0x8] sm:$0xff]
        %v280 = vadd.f32 %v275, %v278
        %v281 = vadd.f32 %v277, %v279
        %v282 = vld [vmem:[#allocation5] sm:$0xff]
        %v283 = vld [vmem:[#allocation5 + $0x8] sm:$0xff]
        %v284 = vmul.f32 %v282, 0.9
        %v285 = vmul.f32 %v283, 0.9
        %v286 = vsub.f32 %v280, %v284
        %v287 = vsub.f32 %v281, %v285
        %v288 = vld [vmem:[#allocation4] sm:$0xff]
        %v289 = vld [vmem:[#allocation4 + $0x8] sm:$0xff]
        %v290 = vmul.f32 %v288, 0.00078125
        %v291 = vmul.f32 %v289, 0.00078125
        %v292 = vsub.f32 %v286, %v290
        %v293 = vsub.f32 %v287, %v291
        %294 = vst.msk [vmem:[%s168] sm:$0xff] %vm234, %v292
        %295 = vst.msk [vmem:[%s168 + $0x8] sm:$0xff] %vm234, %v293
      $region36: #{tpu_custom_call.1} parent=27 // pred_fallthru
        _
      %s296 = smul.u32 2, %s17
      %p297 = scmp.lt.s32.totalorder %s296, 7
      %s298 = scalar_select %p297, %s296, 7
      %s299 = smul.addr %s298, 8
      %s300 = scalar_lea.vmem %s2, %s299
      // Predicated region
      $region37: #{tpu_custom_call.1} parent=27 // pred_check
        %p301 = pneg %p92
      $region38: #{tpu_custom_call.1} parent=27 // pred_check_branch
        %303 = sbr.rel (%p301) target = $region40
      $region39: #{tpu_custom_call.1} parent=27 // pred_region
        %s304 = smul.u32 2, %s17
      $region40: #{tpu_custom_call.1} parent=27 // pred_fallthru
        _
    $region28: #{tpu_custom_call.1} parent=5 // pred_fallthru
      _
    %p305 = scmp.le.s32.totalorder 2, %s8
    // Predicated region
    $region41: #{tpu_custom_call.1} parent=5 // pred_check
      %p306 = pneg %p305
    $region42: #{tpu_custom_call.1} parent=5 // pred_check_branch
      %308 = sbr.rel (%p306) target = $region44
    $region43: #{tpu_custom_call.1} parent=5 // pred_region
      %s309 = ssub.s32 %s8, 2
      // Predicated region
      $region45: #{tpu_custom_call.1} parent=43 // pred_check
        %p310 = pneg %p98
      $region46: #{tpu_custom_call.1} parent=43 // pred_check_branch
        %312 = sbr.rel (%p310) target = $region48
      $region47: #{tpu_custom_call.1} parent=43 // pred_region
        %s313 = smul.u32 2, %s19
        %p314 = scmp.lt.s32.totalorder %s313, 7
        %s315 = scalar_select %p314, %s313, 7
        %s316 = smul.addr %s315, 8
        %s317 = scalar_lea.vmem %s2, %s316
      $region48: #{tpu_custom_call.1} parent=43 // pred_fallthru
        _
    $region44: #{tpu_custom_call.1} parent=5 // pred_fallthru
      _
  $region6: #{tpu_custom_call.1} parent=0 // loop_footer
    %s12 = sadd.s32 1, %s8
  $region7: #{tpu_custom_call.1} parent=0 // loop_footer_branch
    %7 = sbr.rel target = $region3
  $region8: #{tpu_custom_call.1} parent=0 // loop_exit
    _

</llo_original>
